<compile_context>
chip_gen: v6e
topology: v6e:2x2x1
jax: 0.10.0
libtpu: 0.0.40
codegen_flags: <defaults>
</compile_context>

<pallas_src>
import functools

import jax
import jax.numpy as jnp
from jax.experimental import pallas as pl
from jax.experimental.pallas import tpu as pltpu

_LANES = 128  # lane-dense padding target for Cout / num_classes


# ----------------------------------------------------------------------------
# Fused kernel: conv-as-matmul + bias + ReLU -> running spatial sum -> FC head
#   grid = (N, M_tiles)       axis 0: images ("parallel"), axis 1: row tiles
#   patches_ref : (1, TM, K)      im2col rows of the current image tile
#   cw_ref      : (K, 128)        folded conv weight, Cout padded to 128 lanes
#   cb_ref      : (1, 128)        conv bias (padded)
#   fcw_ref     : (128, 128)      FC weight (Cout x classes, both padded)
#   fcb_ref     : (1, 128)        FC bias (padded)
#   out_ref     : (1, 1, 128)     logits for the current image (padded lanes)
#   acc_ref     : VMEM (1, 128)   running spatial sum of ReLU features
# ----------------------------------------------------------------------------
def _fused_conv_pool_fc_kernel(patches_ref, cw_ref, cb_ref, fcw_ref, fcb_ref,
                               out_ref, acc_ref, *, inv_hw):
    m = pl.program_id(1)

    @pl.when(m == 0)
    def _():
        acc_ref[...] = jnp.zeros_like(acc_ref)

    # Conv tile on the MXU, f32 accumulate, + bias, ReLU (all in VMEM/vregs).
    y = jnp.dot(patches_ref[0], cw_ref[...], preferred_element_type=jnp.float32)
    y = jnp.maximum(y + cb_ref[...], 0.0)                       # (TM, 128)

    # Pool numerator: accumulate the spatial sum (divide once at the end).
    acc_ref[...] += jnp.sum(y, axis=0, keepdims=True)           # (1, 128)

    @pl.when(m == pl.num_programs(1) - 1)
    def _():
        pooled = acc_ref[...] * inv_hw                          # (1, 128)
        logits = jnp.dot(pooled, fcw_ref[...],
                         preferred_element_type=jnp.float32) + fcb_ref[...]
        out_ref[0] = logits                                     # (1, 128)


def _im2col_3x3_same(x_nhwc):
    """3x3 'same' patches; output (N, H, W, 9*Cin) with (kh, kw, Cin) ordering."""
    n, h, w, c = x_nhwc.shape
    xp = jnp.pad(x_nhwc, ((0, 0), (1, 1), (1, 1), (0, 0)))
    cols = []
    for dy in range(3):
        for dx in range(3):
            cols.append(xp[:, dy:dy + h, dx:dx + w, :])
    return jnp.concatenate(cols, axis=-1)


def model_wrapper_forward(x_nchw, params):
    """Forward pass of ModelWrapper(small CNN).  x_nchw: (N, C, H, W)."""
    n, c, h, w = x_nchw.shape
    conv_w, conv_b, fc_w, fc_b = params      # conv_w: (27, Cout) for 3-ch model
    cout = conv_w.shape[-1]
    nclass = fc_w.shape[-1]

    x_nhwc = jnp.transpose(x_nchw, (0, 2, 3, 1))                 # -> NHWC

    if c == 1:
        # ModelWrapper.forward: x = x.expand(-1, 3, -1, -1).  The 3 channels
        # are identical copies, so fold the expand into the weights instead of
        # the data: sum conv_w over Cin (K: 27 -> 9), keep x single-channel.
        w_eff = conv_w.reshape(9, 3, cout).sum(axis=1)           # (9, Cout)
        cin_eff = 1
    else:
        # Native multi-channel path must keep the full K = 9*C weight.
        w_eff = conv_w
        cin_eff = c
    k = 9 * cin_eff

    # Lane-dense operands: pad Cout and num_classes to 128 lanes with zeros.
    cw_p = jnp.zeros((k, _LANES), jnp.float32).at[:, :cout].set(w_eff)
    cb_p = jnp.zeros((1, _LANES), jnp.float32).at[:, :cout].set(
        conv_b.reshape(1, cout))
    fcw_p = jnp.zeros((_LANES, _LANES), jnp.float32).at[:cout, :nclass].set(fc_w)
    fcb_p = jnp.zeros((1, _LANES), jnp.float32).at[:, :nclass].set(
        fc_b.reshape(1, nclass))

    # Wrapper-side im2col glue (only 9*Cin_eff columns after the fold).
    patches = _im2col_3x3_same(x_nhwc).reshape(n, h * w, k)

    m_total = h * w
    tm = min(512, m_total)                   # row tile (f32); VMEM-trivial here
    assert m_total % tm == 0, "H*W must be a multiple of the row tile"
    m_tiles = m_total // tm

    cost = pl.CostEstimate(
        flops=2 * n * m_total * k * _LANES + 2 * n * _LANES * _LANES,
        transcendentals=0,
        bytes_accessed=(patches.size + cw_p.size + cb_p.size + fcw_p.size
                        + fcb_p.size + n * _LANES) * 4,
    )

    kernel = functools.partial(_fused_conv_pool_fc_kernel,
                               inv_hw=1.0 / float(m_total))

    out = pl.pallas_call(
        kernel,
        out_shape=jax.ShapeDtypeStruct((n, 1, _LANES), jnp.float32),
        grid_spec=pltpu.PrefetchScalarGridSpec(
            num_scalar_prefetch=0,
            grid=(n, m_tiles),
            in_specs=[
                pl.BlockSpec((1, tm, k), lambda i, j: (i, j, 0)),       # patches
                pl.BlockSpec((k, _LANES), lambda i, j: (0, 0)),         # conv w
                pl.BlockSpec((1, _LANES), lambda i, j: (0, 0)),         # conv b
                pl.BlockSpec((_LANES, _LANES), lambda i, j: (0, 0)),    # fc w
                pl.BlockSpec((1, _LANES), lambda i, j: (0, 0)),         # fc b
            ],
            out_specs=pl.BlockSpec((1, 1, _LANES), lambda i, j: (i, 0, 0)),
            scratch_shapes=[pltpu.VMEM((1, _LANES), jnp.float32)],
        ),
        compiler_params=pltpu.CompilerParams(
            dimension_semantics=("parallel", "arbitrary")),
        cost_estimate=cost,
    )(patches, cw_p, cb_p, fcw_p, fcb_p)

    return out[:, 0, :nclass]


def _reference_forward(x_nchw, params):
    """Plain-JAX reference (literal expand + 27-wide conv) for correctness."""
    n, c, h, w = x_nchw.shape
    if c == 1:
        x_nchw = jnp.broadcast_to(x_nchw, (n, 3, h, w))
        c = 3
    x = jnp.transpose(x_nchw, (0, 2, 3, 1))
    conv_w, conv_b, fc_w, fc_b = params
    patches = _im2col_3x3_same(x).reshape(n * h * w, 9 * c)
    y = jnp.maximum(patches @ conv_w + conv_b, 0.0)
    feat = y.reshape(n, h * w, -1)
    pooled = feat.mean(axis=1)
    return pooled @ fc_w + fc_b


if __name__ == "__main__":
    key = jax.random.PRNGKey(0)
    k_x, k_cw, k_cb, k_fw, k_fb = jax.random.split(key, 5)

    N, CIN, H, W = 2, 1, 16, 16          # 1-channel input -> exercises expand
    COUT, NCLASS = 16, 10

    x = jax.random.normal(k_x, (N, CIN, H, W), dtype=jnp.float32)

    # Deterministic parameter init (Conv2d(3,16,3,padding=1) + Linear(16,10)).
    # Conv weight stored as (kh*kw*Cin, Cout) matching im2col ordering.
    conv_w = 0.1 * jax.random.normal(k_cw, (9 * 3, COUT), dtype=jnp.float32)
    conv_b = 0.1 * jax.random.normal(k_cb, (1, COUT), dtype=jnp.float32)
    fc_w = 0.1 * jax.random.normal(k_fw, (COUT, NCLASS), dtype=jnp.float32)
    fc_b = 0.1 * jax.random.normal(k_fb, (1, NCLASS), dtype=jnp.float32)
    params = (conv_w, conv_b, fc_w, fc_b)

    out = jax.jit(model_wrapper_forward)(x, params)
    out = jax.block_until_ready(out)

    ref = _reference_forward(x, params)
    assert out.shape == (N, NCLASS)
    assert jnp.allclose(out, ref, atol=1e-4, rtol=1e-4)

    print("KERNEL_OK")
</pallas_src>

<mosaic_0001>
module attributes {stable_mosaic.version = 11 : i64} {
  func.func @_fused_conv_pool_fc_kernel(%arg0: i32, %arg1: i32, %arg2: memref<1x256x9xf32, #tpu.memory_space<vmem>>, %arg3: memref<9x128xf32, #tpu.memory_space<vmem>>, %arg4: memref<1x128xf32, #tpu.memory_space<vmem>>, %arg5: memref<128x128xf32, #tpu.memory_space<vmem>>, %arg6: memref<1x128xf32, #tpu.memory_space<vmem>>, %arg7: memref<1x1x128xf32, #tpu.memory_space<vmem>>, %arg8: memref<1x128xf32, #tpu.memory_space<vmem>>) attributes {dimension_semantics = [#tpu.dimension_semantics<parallel>, #tpu.dimension_semantics<arbitrary>], iteration_bounds = array<i64: 2, 1>, scalar_prefetch = 0 : i64, scratch_operands = 1 : i64, tpu.core_type = #tpu.core_type<tc>, window_params = [{transform_indices = @transform_0, window_bounds = array<i64: 1, 256, 9>}, {pipeline_mode = #tpu.pipeline_mode<synchronous>, transform_indices = @transform_1, window_bounds = array<i64: 9, 128>}, {pipeline_mode = #tpu.pipeline_mode<synchronous>, transform_indices = @transform_2, window_bounds = array<i64: 1, 128>}, {pipeline_mode = #tpu.pipeline_mode<synchronous>, transform_indices = @transform_3, window_bounds = array<i64: 128, 128>}, {pipeline_mode = #tpu.pipeline_mode<synchronous>, transform_indices = @transform_4, window_bounds = array<i64: 1, 128>}, {transform_indices = @transform_5, window_bounds = array<i64: 1, 1, 128>}]} {
    %c0_i32 = arith.constant 0 : i32
    %0 = arith.cmpi eq, %arg1, %c0_i32 : i32
    %1 = arith.extui %0 : i1 to i32
    %c0_i32_0 = arith.constant 0 : i32
    %2 = arith.cmpi ne, %1, %c0_i32_0 : i32
    scf.if %2 {
      %cst_15 = arith.constant 0.000000e+00 : f32
      %20 = vector.broadcast %cst_15 : f32 to vector<1x128xf32>
      %c0_16 = arith.constant 0 : index
      %c0_17 = arith.constant 0 : index
      %21 = vector.load %arg8[%c0_16, %c0_17] : memref<1x128xf32, #tpu.memory_space<vmem>>, vector<1x128xf32>
      tpu.vector_store %arg8[%c0_16, %c0_17], %20 {strides = array<i32>} : memref<1x128xf32, #tpu.memory_space<vmem>>, vector<1x128xf32>,
    } else {
    }
    %c0 = arith.constant 0 : index
    %c0_1 = arith.constant 0 : index
    %c0_2 = arith.constant 0 : index
    %3 = vector.load %arg2[%c0, %c0_1, %c0_2] : memref<1x256x9xf32, #tpu.memory_space<vmem>>, vector<1x256x9xf32>
    %4 = vector.shape_cast %3 : vector<1x256x9xf32> to vector<256x9xf32>
    %c0_3 = arith.constant 0 : index
    %c0_4 = arith.constant 0 : index
    %5 = vector.load %arg3[%c0_3, %c0_4] : memref<9x128xf32, #tpu.memory_space<vmem>>, vector<9x128xf32>
    %cst = arith.constant dense<0.000000e+00> : vector<256x128xf32>
    %6 = tpu.matmul %4, %5, %cst {dimension_numbers = #tpu.dot_dimension_numbers<[1], [0], [0], [1], [0, 0, 1, 1], [], []>} : vector<256x9xf32>, vector<9x128xf32>, vector<256x128xf32> -> vector<256x128xf32>
    %c0_5 = arith.constant 0 : index
    %c0_6 = arith.constant 0 : index
    %7 = vector.load %arg4[%c0_5, %c0_6] : memref<1x128xf32, #tpu.memory_space<vmem>>, vector<1x128xf32>
    %8 = vector.broadcast %7 : vector<1x128xf32> to vector<256x128xf32>
    %9 = arith.addf %6, %8 : vector<256x128xf32>
    %cst_7 = arith.constant 0.000000e+00 : f32
    %10 = vector.broadcast %cst_7 : f32 to vector<256x128xf32>
    %11 = arith.maximumf %9, %10 : vector<256x128xf32>
    %c0_8 = arith.constant 0 : index
    %c0_9 = arith.constant 0 : index
    %12 = vector.load %arg8[%c0_8, %c0_9] : memref<1x128xf32, #tpu.memory_space<vmem>>, vector<1x128xf32>
    %cst_10 = arith.constant dense<0.000000e+00> : vector<128xf32>
    %13 = vector.multi_reduction <add>, %11, %cst_10 [0] : vector<256x128xf32> to vector<128xf32>
    %14 = vector.shape_cast %13 : vector<128xf32> to vector<1x128xf32>
    %15 = arith.addf %12, %14 : vector<1x128xf32>
    %c0_11 = arith.constant 0 : index
    %c0_12 = arith.constant 0 : index
    %16 = vector.load %arg8[%c0_11, %c0_12] : memref<1x128xf32, #tpu.memory_space<vmem>>, vector<1x128xf32>
    tpu.vector_store %arg8[%c0_11, %c0_12], %15 {strides = array<i32>} : memref<1x128xf32, #tpu.memory_space<vmem>>, vector<1x128xf32>,
    %c0_i32_13 = arith.constant 0 : i32
    %17 = arith.cmpi eq, %arg1, %c0_i32_13 : i32
    %18 = arith.extui %17 : i1 to i32
    %c0_i32_14 = arith.constant 0 : i32
    %19 = arith.cmpi ne, %18, %c0_i32_14 : i32
    scf.if %19 {
      %c0_15 = arith.constant 0 : index
      %c0_16 = arith.constant 0 : index
      %20 = vector.load %arg8[%c0_15, %c0_16] : memref<1x128xf32, #tpu.memory_space<vmem>>, vector<1x128xf32>
      %cst_17 = arith.constant 3.906250e-03 : f32
      %21 = vector.broadcast %cst_17 : f32 to vector<1x128xf32>
      %22 = arith.mulf %20, %21 : vector<1x128xf32>
      %c0_18 = arith.constant 0 : index
      %c0_19 = arith.constant 0 : index
      %23 = vector.load %arg5[%c0_18, %c0_19] : memref<128x128xf32, #tpu.memory_space<vmem>>, vector<128x128xf32>
      %cst_20 = arith.constant dense<0.000000e+00> : vector<1x128xf32>
      %24 = tpu.matmul %22, %23, %cst_20 {dimension_numbers = #tpu.dot_dimension_numbers<[1], [0], [0], [1], [0, 0, 1, 1], [], []>} : vector<1x128xf32>, vector<128x128xf32>, vector<1x128xf32> -> vector<1x128xf32>
      %c0_21 = arith.constant 0 : index
      %c0_22 = arith.constant 0 : index
      %25 = vector.load %arg6[%c0_21, %c0_22] : memref<1x128xf32, #tpu.memory_space<vmem>>, vector<1x128xf32>
      %26 = arith.addf %24, %25 : vector<1x128xf32>
      %c0_23 = arith.constant 0 : index
      %c0_24 = arith.constant 0 : index
      %c0_25 = arith.constant 0 : index
      %27 = vector.load %arg7[%c0_23, %c0_24, %c0_25] : memref<1x1x128xf32, #tpu.memory_space<vmem>>, vector<1x1x128xf32>
      %28 = vector.shape_cast %27 : vector<1x1x128xf32> to vector<1x128xf32>
      %29 = vector.shape_cast %26 : vector<1x128xf32> to vector<1x1x128xf32>
      tpu.vector_store %arg7[%c0_23, %c0_24, %c0_25], %29 {strides = array<i32>} : memref<1x1x128xf32, #tpu.memory_space<vmem>>, vector<1x1x128xf32>,
    } else {
    }
    return
  }
  func.func @transform_0(%arg0: i32, %arg1: i32) -> (i32, i32, i32) {
    %c0_i32 = arith.constant 0 : i32
    %c0_i32_0 = arith.constant 0 : i32
    return %arg0, %arg1, %c0_i32 : i32, i32, i32
  }
  func.func @transform_1(%arg0: i32, %arg1: i32) -> (i32, i32) {
    %c0_i32 = arith.constant 0 : i32
    %c0_i32_0 = arith.constant 0 : i32
    %c0_i32_1 = arith.constant 0 : i32
    return %c0_i32, %c0_i32_0 : i32, i32
  }
  func.func @transform_2(%arg0: i32, %arg1: i32) -> (i32, i32) {
    %c0_i32 = arith.constant 0 : i32
    %c0_i32_0 = arith.constant 0 : i32
    %c0_i32_1 = arith.constant 0 : i32
    return %c0_i32, %c0_i32_0 : i32, i32
  }
  func.func @transform_3(%arg0: i32, %arg1: i32) -> (i32, i32) {
    %c0_i32 = arith.constant 0 : i32
    %c0_i32_0 = arith.constant 0 : i32
    %c0_i32_1 = arith.constant 0 : i32
    return %c0_i32, %c0_i32_0 : i32, i32
  }
  func.func @transform_4(%arg0: i32, %arg1: i32) -> (i32, i32) {
    %c0_i32 = arith.constant 0 : i32
    %c0_i32_0 = arith.constant 0 : i32
    %c0_i32_1 = arith.constant 0 : i32
    return %c0_i32, %c0_i32_0 : i32, i32
  }
  func.func @transform_5(%arg0: i32, %arg1: i32) -> (i32, i32, i32) {
    %c0_i32 = arith.constant 0 : i32
    %c0_i32_0 = arith.constant 0 : i32
    %c0_i32_1 = arith.constant 0 : i32
    return %arg0, %c0_i32, %c0_i32_0 : i32, i32, i32
  }
}

</mosaic_0001>

<llo_original>
// kernel: model_wrapper_forward.1
$region0: #{model_wrapper_forward.1}
  #allocation0 [shape = 'u32[]', space=smem, size = 0x4, offset = 0x4, fixed_abs, tag = 'smem constant byte address 0x4 - core index']
  #allocation1 [shape = 'u32[144,128]{1,0:T(1,128)}', space=vmem, size = 0x12000, scoped, tag = 'internal scratch']
  #allocation2 [shape = 'f32[1,128]{1,0:T(1,128)}', space=vmem, size = 0x200, scoped, tag = 'scratch operand']
  %s0 = inlined_call_operand.vmem [shape: f32[2,256,9], index: 0, kind: input, shape index: {}]
  %s1 = inlined_call_operand.vmem [shape: f32[9,128], index: 1, kind: input, shape index: {}]
  %s2 = inlined_call_operand.vmem [shape: f32[1,128], index: 2, kind: input, shape index: {}]
  %s3 = inlined_call_operand.vmem [shape: f32[128,128], index: 3, kind: input, shape index: {}]
  %s4 = inlined_call_operand.vmem [shape: f32[1,128], index: 4, kind: input, shape index: {}]
  %s5 = inlined_call_operand.hbm [shape: f32[2,1,128], index: 5, kind: output, shape index: {}]
  %s6 = sld [smem:[#allocation0]]
  $region61: #{model_wrapper_forward.1} parent=0
    _
  %s8 = ssub.s32 1, %s6
  %s9 = scalar_select 0, %s8, %s6
  $region1: #{model_wrapper_forward.1} parent=0
    #allocation3 [shape = 'u8[1024]{0}', space=vmem, size = 0x400, scoped, tag = 'output window, operand 0']
    #allocation4 [shape = 's32[2]{0}', space=sflag, size = 0x8, scoped, tag = 'scoped memory for model_wrapper_forward.1']
    %10 = vsyncpa [#allocation4], 0
    %s11 = scalar_lea.sflag [#allocation4], 1
    %12 = vsyncpa %s11, 0
    loop: start=0, step=1, limit=4
    $region2: #{model_wrapper_forward.1} parent=1 // loop_pre_header
      _
    $region3: #{model_wrapper_forward.1} parent=1 // loop_header
      %s14 = sphi 0, %s18
      %p15 = scmp.ge.s32.totalorder %s14, 4
      %s21 = sphi 0, %s33
      %s22 = sphi 0, %s29
      %s23 = sphi 0, %s21
      %s24 = sphi 0, %s22
      %s25 = sphi 0, %s23
      %s26 = sphi 0, %s24
      %s38 = sphi 0, %s40
      %s41 = sphi 0, %s38
      %s42 = sphi 0, %s41
      %s58 = sphi 0, %s42
      %s62 = sphi 0, %s62
      %s64 = sphi 0, %s62
      %s65 = sphi 0, %s64
      %s79 = sphi 0, %s65
      %s83 = sphi 0, %s83
      %s85 = sphi 0, %s83
      %s86 = sphi 0, %s85
      %s100 = sphi 0, %s86
      %s104 = sphi 0, %s104
      %s106 = sphi 0, %s104
      %s107 = sphi 0, %s106
      %s121 = sphi 0, %s107
      %s125 = sphi 0, %s125
      %s127 = sphi 0, %s125
      %s128 = sphi 0, %s127
      %s142 = sphi 0, %s128
      %s148 = sphi 0, %s150
      %s151 = sphi 0, %s148
      %s152 = sphi 0, %s151
      %s168 = sphi 0, %s152
    $region4: #{model_wrapper_forward.1} parent=1 // loop_header_branch
      %17 = sbr.rel (%p15) target = $region8
    $region5: #{model_wrapper_forward.1} parent=1 // loop_body
      %s19 = ssub.s32 %s14, 1
      %s20 = ssub.s32 %s14, 2
      %s27 = sadd.s32 1, %s22
      %p28 = scmp.ge.s32.totalorder %s27, 1
      %s29 = scalar_select %p28, 0, %s27
      %s30 = sadd.s32 1, %s21
      %s31 = scalar_select %p28, %s30, %s21
      %p32 = scmp.ge.s32.totalorder %s31, 2
      %s33 = scalar_select %p32, 0, %s31
      %s34 = ssub.s32 %s21, %s33
      %s35 = ssub.s32 %s22, %s29
      %s36 = sor.u32 %s34, %s35
      %p37 = scmp.eq.s32.totalorder %s36, 0
      %s39 = sadd.s32 %s38, 1
      %s40 = scalar_select %p37, %s38, %s39
      %p43 = pneg %p37
      %p44 = scmp.eq.s32.totalorder %s14, 1
      %p45 = por %p43, %p44
      %p46 = scmp.ne.s32.totalorder %s38, %s41
      %p47 = scmp.eq.s32.totalorder %s14, 0
      %p48 = por %p46, %p47
      %p49 = scmp.ne.s32.totalorder %s38, %s41
      %p50 = scmp.eq.s32.totalorder %s19, 1
      %p51 = por %p49, %p50
      %p52 = scmp.ne.s32.totalorder %s41, %s42
      %p53 = scmp.eq.s32.totalorder %s19, 0
      %p54 = por %p52, %p53
      %p55 = scmp.ne.s32.totalorder %s41, %s42
      %p56 = scmp.eq.s32.totalorder %s20, 1
      %p57 = por %p55, %p56
      %p59 = scmp.ne.s32.totalorder %s42, %s58
      %p60 = scmp.eq.s32.totalorder %s20, 0
      %p61 = por %p59, %p60
      %s63 = sadd.s32 %s62, 1
      %p66 = scmp.eq.s32.totalorder %s14, 1
      %p67 = scmp.ne.s32.totalorder %s62, %s64
      %p68 = scmp.eq.s32.totalorder %s14, 0
      %p69 = por %p67, %p68
      %p70 = scmp.ne.s32.totalorder %s62, %s64
      %p71 = scmp.eq.s32.totalorder %s19, 1
      %p72 = por %p70, %p71
      %p73 = scmp.ne.s32.totalorder %s64, %s65
      %p74 = scmp.eq.s32.totalorder %s19, 0
      %p75 = por %p73, %p74
      %p76 = scmp.ne.s32.totalorder %s64, %s65
      %p77 = scmp.eq.s32.totalorder %s20, 1
      %p78 = por %p76, %p77
      %p80 = scmp.ne.s32.totalorder %s65, %s79
      %p81 = scmp.eq.s32.totalorder %s20, 0
      %p82 = por %p80, %p81
      %s84 = sadd.s32 %s83, 1
      %p87 = scmp.eq.s32.totalorder %s14, 1
      %p88 = scmp.ne.s32.totalorder %s83, %s85
      %p89 = scmp.eq.s32.totalorder %s14, 0
      %p90 = por %p88, %p89
      %p91 = scmp.ne.s32.totalorder %s83, %s85
      %p92 = scmp.eq.s32.totalorder %s19, 1
      %p93 = por %p91, %p92
      %p94 = scmp.ne.s32.totalorder %s85, %s86
      %p95 = scmp.eq.s32.totalorder %s19, 0
      %p96 = por %p94, %p95
      %p97 = scmp.ne.s32.totalorder %s85, %s86
      %p98 = scmp.eq.s32.totalorder %s20, 1
      %p99 = por %p97, %p98
      %p101 = scmp.ne.s32.totalorder %s86, %s100
      %p102 = scmp.eq.s32.totalorder %s20, 0
      %p103 = por %p101, %p102
      %s105 = sadd.s32 %s104, 1
      %p108 = scmp.eq.s32.totalorder %s14, 1
      %p109 = scmp.ne.s32.totalorder %s104, %s106
      %p110 = scmp.eq.s32.totalorder %s14, 0
      %p111 = por %p109, %p110
      %p112 = scmp.ne.s32.totalorder %s104, %s106
      %p113 = scmp.eq.s32.totalorder %s19, 1
      %p114 = por %p112, %p113
      %p115 = scmp.ne.s32.totalorder %s106, %s107
      %p116 = scmp.eq.s32.totalorder %s19, 0
      %p117 = por %p115, %p116
      %p118 = scmp.ne.s32.totalorder %s106, %s107
      %p119 = scmp.eq.s32.totalorder %s20, 1
      %p120 = por %p118, %p119
      %p122 = scmp.ne.s32.totalorder %s107, %s121
      %p123 = scmp.eq.s32.totalorder %s20, 0
      %p124 = por %p122, %p123
      %s126 = sadd.s32 %s125, 1
      %p129 = scmp.eq.s32.totalorder %s14, 1
      %p130 = scmp.ne.s32.totalorder %s125, %s127
      %p131 = scmp.eq.s32.totalorder %s14, 0
      %p132 = por %p130, %p131
      %p133 = scmp.ne.s32.totalorder %s125, %s127
      %p134 = scmp.eq.s32.totalorder %s19, 1
      %p135 = por %p133, %p134
      %p136 = scmp.ne.s32.totalorder %s127, %s128
      %p137 = scmp.eq.s32.totalorder %s19, 0
      %p138 = por %p136, %p137
      %p139 = scmp.ne.s32.totalorder %s127, %s128
      %p140 = scmp.eq.s32.totalorder %s20, 1
      %p141 = por %p139, %p140
      %p143 = scmp.ne.s32.totalorder %s128, %s142
      %p144 = scmp.eq.s32.totalorder %s20, 0
      %p145 = por %p143, %p144
      %s146 = ssub.s32 %s21, %s33
      %p147 = scmp.eq.s32.totalorder %s146, 0
      %s149 = sadd.s32 %s148, 1
      %s150 = scalar_select %p147, %s148, %s149
      %p153 = pneg %p147
      %p154 = scmp.eq.s32.totalorder %s14, 1
      %p155 = por %p153, %p154
      %p156 = scmp.ne.s32.totalorder %s148, %s151
      %p157 = scmp.eq.s32.totalorder %s14, 0
      %p158 = por %p156, %p157
      %p159 = scmp.ne.s32.totalorder %s148, %s151
      %p160 = scmp.eq.s32.totalorder %s19, 1
      %p161 = por %p159, %p160
      %p162 = scmp.ne.s32.totalorder %s151, %s152
      %p163 = scmp.eq.s32.totalorder %s19, 0
      %p164 = por %p162, %p163
      %p165 = scmp.ne.s32.totalorder %s151, %s152
      %p166 = scmp.eq.s32.totalorder %s20, 1
      %p167 = por %p165, %p166
      %p169 = scmp.ne.s32.totalorder %s152, %s168
      %p170 = scmp.eq.s32.totalorder %s20, 0
      %p171 = por %p169, %p170
      %p172 = scmp.le.s32.totalorder 1, %s14
      %p173 = scmp.lt.s32.totalorder %s14, 3
      %p174 = pnand %p172, %p173
      %p175 = pneg %p174
      // Predicated region
      $region9: #{model_wrapper_forward.1} parent=5 // pred_check
        _
      $region10: #{model_wrapper_forward.1} parent=5 // pred_check_branch
        %177 = sbr.rel (%p174) target = $region12
      $region11: #{model_wrapper_forward.1} parent=5 // pred_region
        %s178 = ssub.s32 %s14, 1
        // Predicated region
        $region13: #{model_wrapper_forward.1} parent=11 // pred_check
          %p179 = pneg %p75
        $region14: #{model_wrapper_forward.1} parent=11 // pred_check_branch
          %181 = sbr.rel (%p179) target = $region16
        $region15: #{model_wrapper_forward.1} parent=11 // pred_region
          _
        $region16: #{model_wrapper_forward.1} parent=11 // pred_fallthru
          _
        // Predicated region
        $region17: #{model_wrapper_forward.1} parent=11 // pred_check
          %p182 = pneg %p96
        $region18: #{model_wrapper_forward.1} parent=11 // pred_check_branch
          %184 = sbr.rel (%p182) target = $region20
        $region19: #{model_wrapper_forward.1} parent=11 // pred_region
          _
        $region20: #{model_wrapper_forward.1} parent=11 // pred_fallthru
          _
        // Predicated region
        $region21: #{model_wrapper_forward.1} parent=11 // pred_check
          %p185 = pneg %p117
        $region22: #{model_wrapper_forward.1} parent=11 // pred_check_branch
          %187 = sbr.rel (%p185) target = $region24
        $region23: #{model_wrapper_forward.1} parent=11 // pred_region
          _
        $region24: #{model_wrapper_forward.1} parent=11 // pred_fallthru
          _
        // Predicated region
        $region25: #{model_wrapper_forward.1} parent=11 // pred_check
          %p188 = pneg %p138
        $region26: #{model_wrapper_forward.1} parent=11 // pred_check_branch
          %190 = sbr.rel (%p188) target = $region28
        $region27: #{model_wrapper_forward.1} parent=11 // pred_region
          _
        $region28: #{model_wrapper_forward.1} parent=11 // pred_fallthru
          _
      $region12: #{model_wrapper_forward.1} parent=5 // pred_fallthru
        _
      %p191 = scmp.lt.s32.totalorder %s14, 2
      // Predicated region
      $region29: #{model_wrapper_forward.1} parent=5 // pred_check
        %p192 = pneg %p191
      $region30: #{model_wrapper_forward.1} parent=5 // pred_check_branch
        %194 = sbr.rel (%p192) target = $region32
      $region31: #{model_wrapper_forward.1} parent=5 // pred_region
        // Predicated region
        $region33: #{model_wrapper_forward.1} parent=31 // pred_check
          %p195 = pneg %p48
        $region34: #{model_wrapper_forward.1} parent=31 // pred_check_branch
          %197 = sbr.rel (%p195) target = $region36
        $region35: #{model_wrapper_forward.1} parent=31 // pred_region
          %s198 = smul.u32 32, %s22
          %p199 = scmp.lt.s32.totalorder %s21, 1
          %s200 = scalar_select %p199, %s21, 1
          %p201 = scmp.lt.s32.totalorder %s198, 31
          %s202 = scalar_select %p201, %s198, 31
          %s203 = smul.addr %s200, 32
          %s204 = sadd.s32 %s202, %s203
          %s205 = smul.addr %s204, 8
          %s206 = scalar_lea.vmem %s0, %s205
          %s207 = smul.u32 32, %s22
        $region36: #{model_wrapper_forward.1} parent=31 // pred_fallthru
          _
      $region32: #{model_wrapper_forward.1} parent=5 // pred_fallthru
        _
      %p208 = scmp.le.s32.totalorder 1, %s14
      %p209 = scmp.lt.s32.totalorder %s14, 3
      %p210 = pnand %p208, %p209
      %p211 = pneg %p210
      // Predicated region
      $region37: #{model_wrapper_forward.1} parent=5 // pred_check
        _
      $region38: #{model_wrapper_forward.1} parent=5 // pred_check_branch
        %213 = sbr.rel (%p210) target = $region40
      $region39: #{model_wrapper_forward.1} parent=5 // pred_region
        %s214 = ssub.s32 %s14, 1
        %s215 = smul.u32 32, %s24
        %p216 = scmp.lt.s32.totalorder %s23, 1
        %s217 = scalar_select %p216, %s23, 1
        %p218 = scmp.lt.s32.totalorder %s215, 31
        %s219 = scalar_select %p218, %s215, 31
        %s220 = smul.addr %s217, 32
        %s221 = sadd.s32 %s219, %s220
        %s222 = smul.addr %s221, 8
        %s223 = scalar_lea.vmem %s0, %s222
        %p224 = pneg %p54
        %p225 = pneg %p51
        %p226 = pneg %p75
        %p227 = pneg %p72
        %p228 = pneg %p96
        %p229 = pneg %p93
        %p230 = pneg %p117
        %p231 = pneg %p114
        %p232 = pneg %p138
        %p233 = pneg %p135
        %p234 = pneg %p164
        %p235 = pneg %p161
        %s236 = sand.u32 %s151, 1
        %s237 = scalar_lea.sflag [#allocation4], %s236
        %s238 = sand.u32 %s151, 1
        %s239 = scalar_lea.vmem [#allocation3], %s238
        %s240 = smul.u32 32, %s24
        %p241 = scmp.lt.s32.totalorder %s23, 1
        %s242 = scalar_select %p241, %s23, 1
        %p243 = scmp.lt.s32.totalorder %s240, 31
        %s244 = scalar_select %p243, %s240, 31
        %s245 = smul.addr %s242, 32
        %s246 = sadd.s32 %s244, %s245
        %s247 = smul.addr %s246, 8
        %s248 = scalar_lea.vmem %s0, %s247
        %s249 = smul.u32 32, %s24
        %p250 = scmp.eq.s32.totalorder %s24, 0
        // Predicated region
        $region41: #{model_wrapper_forward.1} parent=39 // pred_check
          %p251 = pneg %p250
        $region42: #{model_wrapper_forward.1} parent=39 // pred_check_branch
          %253 = sbr.rel (%p251) target = $region44
        $region43: #{model_wrapper_forward.1} parent=39 // pred_region
          %254 = vst [vmem:[#allocation2] sm:$0x1] 0.0
        $region44: #{model_wrapper_forward.1} parent=39 // pred_fallthru
          _
        %v255 = vld [vmem:[%s248] sm:$0xff]
        %v256 = vld [vmem:[%s248 + $0x8] sm:$0xff]
        %v257 = vld [vmem:[%s248 + $0x10] sm:$0xff]
        %v258 = vld [vmem:[%s248 + $0x18] sm:$0xff]
        %v259 = vld [vmem:[%s248 + $0x20] sm:$0xff]
        %v260 = vld [vmem:[%s248 + $0x28] sm:$0xff]
        %v261 = vld [vmem:[%s248 + $0x30] sm:$0xff]
        %v262 = vld [vmem:[%s248 + $0x38] sm:$0xff]
        %v263 = vld [vmem:[%s248 + $0x40] sm:$0xff]
        %v264 = vld [vmem:[%s248 + $0x48] sm:$0xff]
        %v265 = vld [vmem:[%s248 + $0x50] sm:$0xff]
        %v266 = vld [vmem:[%s248 + $0x58] sm:$0xff]
        %v267 = vld [vmem:[%s248 + $0x60] sm:$0xff]
        %v268 = vld [vmem:[%s248 + $0x68] sm:$0xff]
        %v269 = vld [vmem:[%s248 + $0x70] sm:$0xff]
        %v270 = vld [vmem:[%s248 + $0x78] sm:$0xff]
        %v271 = vld [vmem:[%s248 + $0x80] sm:$0xff]
        %v272 = vld [vmem:[%s248 + $0x88] sm:$0xff]
        %v273 = vld [vmem:[%s248 + $0x90] sm:$0xff]
        %v274 = vld [vmem:[%s248 + $0x98] sm:$0xff]
        %v275 = vld [vmem:[%s248 + $0xa0] sm:$0xff]
        %v276 = vld [vmem:[%s248 + $0xa8] sm:$0xff]
        %v277 = vld [vmem:[%s248 + $0xb0] sm:$0xff]
        %v278 = vld [vmem:[%s248 + $0xb8] sm:$0xff]
        %v279 = vld [vmem:[%s248 + $0xc0] sm:$0xff]
        %v280 = vld [vmem:[%s248 + $0xc8] sm:$0xff]
        %v281 = vld [vmem:[%s248 + $0xd0] sm:$0xff]
        %v282 = vld [vmem:[%s248 + $0xd8] sm:$0xff]
        %v283 = vld [vmem:[%s248 + $0xe0] sm:$0xff]
        %v284 = vld [vmem:[%s248 + $0xe8] sm:$0xff]
        %v285 = vld [vmem:[%s248 + $0xf0] sm:$0xff]
        %v286 = vld [vmem:[%s248 + $0xf8] sm:$0xff]
        %v287 = vld [vmem:[%s1] sm:$0xff]
        %v288 = vld [vmem:[%s1 + $0x8] sm:$0x1]
        %v289 = vld [vmem:[%s2] sm:$0x1]
        %v291 = vlaneseq
        %v292 = vshrl.u32 %v291, 7
        %v293 = vsub.s32 0, %v292
        %v294 = vrot.slane %v289, %v293
        %vm296 = vcmask 72704
        %v298 = vsel %vm296, %v255, 0
        %v301 = vsel %vm296, %v256, 0
        %v304 = vsel %vm296, %v257, 0
        %v307 = vsel %vm296, %v258, 0
        %v310 = vsel %vm296, %v259, 0
        %v313 = vsel %vm296, %v260, 0
        %v316 = vsel %vm296, %v261, 0
        %v319 = vsel %vm296, %v262, 0
        %v322 = vsel %vm296, %v263, 0
        %v325 = vsel %vm296, %v264, 0
        %v328 = vsel %vm296, %v265, 0
        %v331 = vsel %vm296, %v266, 0
        %v334 = vsel %vm296, %v267, 0
        %v337 = vsel %vm296, %v268, 0
        %v340 = vsel %vm296, %v269, 0
        %v343 = vsel %vm296, %v270, 0
        %v346 = vsel %vm296, %v271, 0
        %v349 = vsel %vm296, %v272, 0
        %v352 = vsel %vm296, %v273, 0
        %v355 = vsel %vm296, %v274, 0
        %v358 = vsel %vm296, %v275, 0
        %v361 = vsel %vm296, %v276, 0
        %v364 = vsel %vm296, %v277, 0
        %v367 = vsel %vm296, %v278, 0
        %v370 = vsel %vm296, %v279, 0
        %v373 = vsel %vm296, %v280, 0
        %v376 = vsel %vm296, %v281, 0
        %v379 = vsel %vm296, %v282, 0
        %v382 = vsel %vm296, %v283, 0
        %v385 = vsel %vm296, %v284, 0
        %v388 = vsel %vm296, %v285, 0
        %v391 = vsel %vm296, %v286, 0
        %vm393 = vcmask 1040384
        %v395 = vsel %vm393, %v288, 0
        %397 = vmatprep.subr.mxu0 0.0
        %398 = vmatpush1.msra.mxu0 0.0
        %399 = vmatprep.subr.mxu0 0.0
        %400 = vmatpush1.msra.mxu0 0.0
        %401 = vmatprep.subr.mxu0 0.0
        %402 = vmatpush1.msra.mxu0 0.0
        %403 = vmatprep.subr.mxu0 0.0
        %404 = vmatpush1.msra.mxu0 0.0
        %405 = vmatprep.subr.mxu0 0.0
        %406 = vmatpush1.msra.mxu0 0.0
        %407 = vmatprep.subr.mxu0 0.0
        %408 = vmatpush1.msra.mxu0 0.0
        %409 = vmatprep.subr.mxu0 0.0
        %410 = vmatpush1.msra.mxu0 0.0
        %411 = vmatprep.subr.mxu0 0.0
        %412 = vmatpush1.msra.mxu0 0.0
        %413 = vmatprep.subr.mxu0 0.0
        %414 = vmatpush1.msra.mxu0 0.0
        %415 = vmatprep.subr.mxu0 0.0
        %416 = vmatpush1.msra.mxu0 0.0
        %417 = vmatprep.subr.mxu0 0.0
        %418 = vmatpush1.msra.mxu0 0.0
        %419 = vmatprep.subr.mxu0 0.0
        %420 = vmatpush1.msra.mxu0 0.0
        %421 = vmatprep.subr.mxu0 0.0
        %422 = vmatpush1.msra.mxu0 0.0
        %423 = vmatprep.subr.mxu0 0.0
        %424 = vmatpush1.msra.mxu0 0.0
        %425 = vmatprep.subr.mxu0 0.0
        %426 = vmatpush1.msra.mxu0 %v395
        %427 = vmatprep.subr.mxu0 0.0
        %428 = vmatpush1.msra.mxu0 %v287
        %429 = vmatprep.subr.mxu0 0.0
        %430 = vmatpush2.msra.mxu0 0.0
        %431 = vmatprep.subr.mxu0 0.0
        %432 = vmatpush2.msra.mxu0 0.0
        %433 = vmatprep.subr.mxu0 0.0
        %434 = vmatpush2.msra.mxu0 0.0
        %435 = vmatprep.subr.mxu0 0.0
        %436 = vmatpush2.msra.mxu0 0.0
        %437 = vmatprep.subr.mxu0 0.0
        %438 = vmatpush2.msra.mxu0 0.0
        %439 = vmatprep.subr.mxu0 0.0
        %440 = vmatpush2.msra.mxu0 0.0
        %441 = vmatprep.subr.mxu0 0.0
        %442 = vmatpush2.msra.mxu0 0.0
        %443 = vmatprep.subr.mxu0 0.0
        %444 = vmatpush2.msra.mxu0 0.0
        %445 = vmatprep.subr.mxu0 0.0
        %446 = vmatpush2.msra.mxu0 0.0
        %447 = vmatprep.subr.mxu0 0.0
        %448 = vmatpush2.msra.mxu0 0.0
        %449 = vmatprep.subr.mxu0 0.0
        %450 = vmatpush2.msra.mxu0 0.0
        %451 = vmatprep.subr.mxu0 0.0
        %452 = vmatpush2.msra.mxu0 0.0
        %453 = vmatprep.subr.mxu0 0.0
        %454 = vmatpush2.msra.mxu0 0.0
        %455 = vmatprep.subr.mxu0 0.0
        %456 = vmatpush2.msra.mxu0 0.0
        %457 = vmatprep.subr.mxu0 0.0
        %458 = vmatpush2.msra.mxu0 0.0
        %459 = vmatprep.subr.mxu0 0.0
        %460 = vmatpush2.msra.mxu0 0.0
        %461 = vmatprep.mubr.f32.mxu0 0.0
        %462 = vmatmul.mubr.f32.gmra.mxu0 %v298
        %v463 = vpop.f32.mrf.mxu0
        %v464 = vadd.f32 %v294, %v463
        %v465 = vpop.f32.mrf.mxu0
        %466 = vmatprep.mubr.f32.mxu0 0.0
        %467 = vmatmul.mubr.f32.gmra.mxu0 %v301
        %v468 = vpop.f32.mrf.mxu0
        %v469 = vadd.f32 %v294, %v468
        %v470 = vpop.f32.mrf.mxu0
        %471 = vmatprep.mubr.f32.mxu0 0.0
        %472 = vmatmul.mubr.f32.gmra.mxu0 %v304
        %v473 = vpop.f32.mrf.mxu0
        %v474 = vadd.f32 %v294, %v473
        %v475 = vpop.f32.mrf.mxu0
        %476 = vmatprep.mubr.f32.mxu0 0.0
        %477 = vmatmul.mubr.f32.gmra.mxu0 %v307
        %v478 = vpop.f32.mrf.mxu0
        %v479 = vadd.f32 %v294, %v478
        %v480 = vpop.f32.mrf.mxu0
        %481 = vmatprep.mubr.f32.mxu0 0.0
        %482 = vmatmul.mubr.f32.gmra.mxu0 %v310
        %v483 = vpop.f32.mrf.mxu0
        %v484 = vadd.f32 %v294, %v483
        %v485 = vpop.f32.mrf.mxu0
        %486 = vmatprep.mubr.f32.mxu0 0.0
        %487 = vmatmul.mubr.f32.gmra.mxu0 %v313
        %v488 = vpop.f32.mrf.mxu0
        %v489 = vadd.f32 %v294, %v488
        %v490 = vpop.f32.mrf.mxu0
        %491 = vmatprep.mubr.f32.mxu0 0.0
        %492 = vmatmul.mubr.f32.gmra.mxu0 %v316
        %v493 = vpop.f32.mrf.mxu0
        %v494 = vadd.f32 %v294, %v493
        %v495 = vpop.f32.mrf.mxu0
        %496 = vmatprep.mubr.f32.mxu0 0.0
        %497 = vmatmul.mubr.f32.gmra.mxu0 %v319
        %v498 = vpop.f32.mrf.mxu0
        %v499 = vadd.f32 %v294, %v498
        %v500 = vpop.f32.mrf.mxu0
        %501 = vmatprep.mubr.f32.mxu0 0.0
        %502 = vmatmul.mubr.f32.gmra.mxu0 %v322
        %v503 = vpop.f32.mrf.mxu0
        %v504 = vadd.f32 %v294, %v503
        %v505 = vpop.f32.mrf.mxu0
        %506 = vmatprep.mubr.f32.mxu0 0.0
        %507 = vmatmul.mubr.f32.gmra.mxu0 %v325
        %v508 = vpop.f32.mrf.mxu0
        %v509 = vadd.f32 %v294, %v508
        %v510 = vpop.f32.mrf.mxu0
        %511 = vmatprep.mubr.f32.mxu0 0.0
        %512 = vmatmul.mubr.f32.gmra.mxu0 %v328
        %v513 = vpop.f32.mrf.mxu0
        %v514 = vadd.f32 %v294, %v513
        %v515 = vpop.f32.mrf.mxu0
        %516 = vmatprep.mubr.f32.mxu0 0.0
        %517 = vmatmul.mubr.f32.gmra.mxu0 %v331
        %v518 = vpop.f32.mrf.mxu0
        %v519 = vadd.f32 %v294, %v518
        %v520 = vpop.f32.mrf.mxu0
        %521 = vmatprep.mubr.f32.mxu0 0.0
        %522 = vmatmul.mubr.f32.gmra.mxu0 %v334
        %v523 = vpop.f32.mrf.mxu0
        %v524 = vadd.f32 %v294, %v523
        %v525 = vpop.f32.mrf.mxu0
        %526 = vmatprep.mubr.f32.mxu0 0.0
        %527 = vmatmul.mubr.f32.gmra.mxu0 %v337
        %v528 = vpop.f32.mrf.mxu0
        %v529 = vadd.f32 %v294, %v528
        %v530 = vpop.f32.mrf.mxu0
        %531 = vmatprep.mubr.f32.mxu0 0.0
        %532 = vmatmul.mubr.f32.gmra.mxu0 %v340
        %v533 = vpop.f32.mrf.mxu0
        %v534 = vadd.f32 %v294, %v533
        %v535 = vpop.f32.mrf.mxu0
        %536 = vmatprep.mubr.f32.mxu0 0.0
        %537 = vmatmul.mubr.f32.gmra.mxu0 %v343
        %v538 = vpop.f32.mrf.mxu0
        %v539 = vadd.f32 %v294, %v538
        %v540 = vpop.f32.mrf.mxu0
        %541 = vmatprep.mubr.f32.mxu0 0.0
        %542 = vmatmul.mubr.f32.gmra.mxu0 %v346
        %v543 = vpop.f32.mrf.mxu0
        %v544 = vadd.f32 %v294, %v543
        %v545 = vpop.f32.mrf.mxu0
        %546 = vmatprep.mubr.f32.mxu0 0.0
        %547 = vmatmul.mubr.f32.gmra.mxu0 %v349
        %v548 = vpop.f32.mrf.mxu0
        %v549 = vadd.f32 %v294, %v548
        %v550 = vpop.f32.mrf.mxu0
        %551 = vmatprep.mubr.f32.mxu0 0.0
        %552 = vmatmul.mubr.f32.gmra.mxu0 %v352
        %v553 = vpop.f32.mrf.mxu0
        %v554 = vadd.f32 %v294, %v553
        %v555 = vpop.f32.mrf.mxu0
        %556 = vmatprep.mubr.f32.mxu0 0.0
        %557 = vmatmul.mubr.f32.gmra.mxu0 %v355
        %v558 = vpop.f32.mrf.mxu0
        %v559 = vadd.f32 %v294, %v558
        %v560 = vpop.f32.mrf.mxu0
        %561 = vmatprep.mubr.f32.mxu0 0.0
        %562 = vmatmul.mubr.f32.gmra.mxu0 %v358
        %v563 = vpop.f32.mrf.mxu0
        %v564 = vadd.f32 %v294, %v563
        %v565 = vpop.f32.mrf.mxu0
        %566 = vmatprep.mubr.f32.mxu0 0.0
        %567 = vmatmul.mubr.f32.gmra.mxu0 %v361
        %v568 = vpop.f32.mrf.mxu0
        %v569 = vadd.f32 %v294, %v568
        %v570 = vpop.f32.mrf.mxu0
        %571 = vmatprep.mubr.f32.mxu0 0.0
        %572 = vmatmul.mubr.f32.gmra.mxu0 %v364
        %v573 = vpop.f32.mrf.mxu0
        %v574 = vadd.f32 %v294, %v573
        %v575 = vpop.f32.mrf.mxu0
        %576 = vmatprep.mubr.f32.mxu0 0.0
        %577 = vmatmul.mubr.f32.gmra.mxu0 %v367
        %v578 = vpop.f32.mrf.mxu0
        %v579 = vadd.f32 %v294, %v578
        %v580 = vpop.f32.mrf.mxu0
        %581 = vmatprep.mubr.f32.mxu0 0.0
        %582 = vmatmul.mubr.f32.gmra.mxu0 %v370
        %v583 = vpop.f32.mrf.mxu0
        %v584 = vadd.f32 %v294, %v583
        %v585 = vpop.f32.mrf.mxu0
        %586 = vmatprep.mubr.f32.mxu0 0.0
        %587 = vmatmul.mubr.f32.gmra.mxu0 %v373
        %v588 = vpop.f32.mrf.mxu0
        %v589 = vadd.f32 %v294, %v588
        %v590 = vpop.f32.mrf.mxu0
        %591 = vmatprep.mubr.f32.mxu0 0.0
        %592 = vmatmul.mubr.f32.gmra.mxu0 %v376
        %v593 = vpop.f32.mrf.mxu0
        %v594 = vadd.f32 %v294, %v593
        %v595 = vpop.f32.mrf.mxu0
        %596 = vmatprep.mubr.f32.mxu0 0.0
        %597 = vmatmul.mubr.f32.gmra.mxu0 %v379
        %v598 = vpop.f32.mrf.mxu0
        %v599 = vadd.f32 %v294, %v598
        %v600 = vpop.f32.mrf.mxu0
        %601 = vmatprep.mubr.f32.mxu0 0.0
        %602 = vmatmul.mubr.f32.gmra.mxu0 %v382
        %v603 = vpop.f32.mrf.mxu0
        %v604 = vadd.f32 %v294, %v603
        %v605 = vpop.f32.mrf.mxu0
        %606 = vmatprep.mubr.f32.mxu0 0.0
        %607 = vmatmul.mubr.f32.gmra.mxu0 %v385
        %v608 = vpop.f32.mrf.mxu0
        %v609 = vadd.f32 %v294, %v608
        %v610 = vpop.f32.mrf.mxu0
        %611 = vmatprep.mubr.f32.mxu0 0.0
        %612 = vmatmul.mubr.f32.gmra.mxu0 %v388
        %v613 = vpop.f32.mrf.mxu0
        %v614 = vadd.f32 %v294, %v613
        %v615 = vpop.f32.mrf.mxu0
        %616 = vmatprep.mubr.f32.mxu0 0.0
        %617 = vmatmul.mubr.f32.gmra.mxu0 %v391
        %v618 = vpop.f32.mrf.mxu0
        %v619 = vadd.f32 %v294, %v618
        %v620 = vpop.f32.mrf.mxu0
        %621 = vdwg.mxu0
        %v622 = vmax.f32 %v464, 0.0
        %v623 = vmax.f32 %v469, 0.0
        %v624 = vmax.f32 %v474, 0.0
        %v625 = vmax.f32 %v479, 0.0
        %v626 = vmax.f32 %v484, 0.0
        %v627 = vmax.f32 %v489, 0.0
        %v628 = vmax.f32 %v494, 0.0
        %v629 = vmax.f32 %v499, 0.0
        %v630 = vmax.f32 %v504, 0.0
        %v631 = vmax.f32 %v509, 0.0
        %v632 = vmax.f32 %v514, 0.0
        %v633 = vmax.f32 %v519, 0.0
        %v634 = vmax.f32 %v524, 0.0
        %v635 = vmax.f32 %v529, 0.0
        %v636 = vmax.f32 %v534, 0.0
        %v637 = vmax.f32 %v539, 0.0
        %v638 = vmax.f32 %v544, 0.0
        %v639 = vmax.f32 %v549, 0.0
        %v640 = vmax.f32 %v554, 0.0
        %v641 = vmax.f32 %v559, 0.0
        %v642 = vmax.f32 %v564, 0.0
        %v643 = vmax.f32 %v569, 0.0
        %v644 = vmax.f32 %v574, 0.0
        %v645 = vmax.f32 %v579, 0.0
        %v646 = vmax.f32 %v584, 0.0
        %v647 = vmax.f32 %v589, 0.0
        %v648 = vmax.f32 %v594, 0.0
        %v649 = vmax.f32 %v599, 0.0
        %v650 = vmax.f32 %v604, 0.0
        %v651 = vmax.f32 %v609, 0.0
        %v652 = vmax.f32 %v614, 0.0
        %v653 = vmax.f32 %v619, 0.0
        %v654 = vld [vmem:[#allocation2] sm:$0x1]
        %v655 = vadd.f32 %v622, %v623
        %v656 = vadd.f32 %v655, %v624
        %v657 = vadd.f32 %v656, %v625
        %v658 = vadd.f32 %v657, %v626
        %v659 = vadd.f32 %v658, %v627
        %v660 = vadd.f32 %v659, %v628
        %v661 = vadd.f32 %v660, %v629
        %v662 = vadd.f32 %v661, %v630
        %v663 = vadd.f32 %v662, %v631
        %v664 = vadd.f32 %v663, %v632
        %v665 = vadd.f32 %v664, %v633
        %v666 = vadd.f32 %v665, %v634
        %v667 = vadd.f32 %v666, %v635
        %v668 = vadd.f32 %v667, %v636
        %v669 = vadd.f32 %v668, %v637
        %v670 = vadd.f32 %v669, %v638
        %v671 = vadd.f32 %v670, %v639
        %v672 = vadd.f32 %v671, %v640
        %v673 = vadd.f32 %v672, %v641
        %v674 = vadd.f32 %v673, %v642
        %v675 = vadd.f32 %v674, %v643
        %v676 = vadd.f32 %v675, %v644
        %v677 = vadd.f32 %v676, %v645
        %v678 = vadd.f32 %v677, %v646
        %v679 = vadd.f32 %v678, %v647
        %v680 = vadd.f32 %v679, %v648
        %v681 = vadd.f32 %v680, %v649
        %v682 = vadd.f32 %v681, %v650
        %v683 = vadd.f32 %v682, %v651
        %v684 = vadd.f32 %v683, %v652
        %v685 = vadd.f32 %v684, %v653
        %v686 = vrot.slane %v685, 4
        %v687 = vadd.f32 %v685, %v686
        %v688 = vrot.slane %v687, 2
        %v689 = vadd.f32 %v687, %v688
        %v690 = vrot.slane %v689, 1
        %v691 = vadd.f32 %v689, %v690
        %v692 = vadd.f32 %v654, %v691
        %693 = vst [vmem:[#allocation2] sm:$0x1] %v692
        // Predicated region
        $region45: #{model_wrapper_forward.1} parent=39 // pred_check
          %p694 = pneg %p250
        $region46: #{model_wrapper_forward.1} parent=39 // pred_check_branch
          %696 = sbr.rel (%p694) target = $region48
        $region47: #{model_wrapper_forward.1} parent=39 // pred_region
          %v697 = vld [vmem:[#allocation2] sm:$0x1]
          %v698 = vmul.f32 %v697, 0.00390625
          %v699 = vld [vmem:[%s3] sm:$0xff]
          %v700 = vld [vmem:[%s3 + $0x8] sm:$0xff]
          %v701 = vld [vmem:[%s3 + $0x10] sm:$0xff]
          %v702 = vld [vmem:[%s3 + $0x18] sm:$0xff]
          %v703 = vld [vmem:[%s3 + $0x20] sm:$0xff]
          %v704 = vld [vmem:[%s3 + $0x28] sm:$0xff]
          %v705 = vld [vmem:[%s3 + $0x30] sm:$0xff]
          %v706 = vld [vmem:[%s3 + $0x38] sm:$0xff]
          %v707 = vld [vmem:[%s3 + $0x40] sm:$0xff]
          %v708 = vld [vmem:[%s3 + $0x48] sm:$0xff]
          %v709 = vld [vmem:[%s3 + $0x50] sm:$0xff]
          %v710 = vld [vmem:[%s3 + $0x58] sm:$0xff]
          %v711 = vld [vmem:[%s3 + $0x60] sm:$0xff]
          %v712 = vld [vmem:[%s3 + $0x68] sm:$0xff]
          %v713 = vld [vmem:[%s3 + $0x70] sm:$0xff]
          %v714 = vld [vmem:[%s3 + $0x78] sm:$0xff]
          %v715 = vld [vmem:[%s4] sm:$0x1]
          %716 = vmatprep.subr.mxu0 0.0
          %717 = vmatpush1.msra.mxu0 %v714
          %718 = vmatprep.subr.mxu0 0.0
          %719 = vmatpush1.msra.mxu0 %v713
          %720 = vmatprep.subr.mxu0 0.0
          %721 = vmatpush1.msra.mxu0 %v712
          %722 = vmatprep.subr.mxu0 0.0
          %723 = vmatpush1.msra.mxu0 %v711
          %724 = vmatprep.subr.mxu0 0.0
          %725 = vmatpush1.msra.mxu0 %v710
          %726 = vmatprep.subr.mxu0 0.0
          %727 = vmatpush1.msra.mxu0 %v709
          %728 = vmatprep.subr.mxu0 0.0
          %729 = vmatpush1.msra.mxu0 %v708
          %730 = vmatprep.subr.mxu0 0.0
          %731 = vmatpush1.msra.mxu0 %v707
          %732 = vmatprep.subr.mxu0 0.0
          %733 = vmatpush1.msra.mxu0 %v706
          %734 = vmatprep.subr.mxu0 0.0
          %735 = vmatpush1.msra.mxu0 %v705
          %736 = vmatprep.subr.mxu0 0.0
          %737 = vmatpush1.msra.mxu0 %v704
          %738 = vmatprep.subr.mxu0 0.0
          %739 = vmatpush1.msra.mxu0 %v703
          %740 = vmatprep.subr.mxu0 0.0
          %741 = vmatpush1.msra.mxu0 %v702
          %742 = vmatprep.subr.mxu0 0.0
          %743 = vmatpush1.msra.mxu0 %v701
          %744 = vmatprep.subr.mxu0 0.0
          %745 = vmatpush1.msra.mxu0 %v700
          %746 = vmatprep.subr.mxu0 0.0
          %747 = vmatpush1.msra.mxu0 %v699
          %748 = vmatprep.subr.mxu0 0.0
          %749 = vmatpush2.msra.mxu0 0.0
          %750 = vmatprep.subr.mxu0 0.0
          %751 = vmatpush2.msra.mxu0 0.0
          %752 = vmatprep.subr.mxu0 0.0
          %753 = vmatpush2.msra.mxu0 0.0
          %754 = vmatprep.subr.mxu0 0.0
          %755 = vmatpush2.msra.mxu0 0.0
          %756 = vmatprep.subr.mxu0 0.0
          %757 = vmatpush2.msra.mxu0 0.0
          %758 = vmatprep.subr.mxu0 0.0
          %759 = vmatpush2.msra.mxu0 0.0
          %760 = vmatprep.subr.mxu0 0.0
          %761 = vmatpush2.msra.mxu0 0.0
          %762 = vmatprep.subr.mxu0 0.0
          %763 = vmatpush2.msra.mxu0 0.0
          %764 = vmatprep.subr.mxu0 0.0
          %765 = vmatpush2.msra.mxu0 0.0
          %766 = vmatprep.subr.mxu0 0.0
          %767 = vmatpush2.msra.mxu0 0.0
          %768 = vmatprep.subr.mxu0 0.0
          %769 = vmatpush2.msra.mxu0 0.0
          %770 = vmatprep.subr.mxu0 0.0
          %771 = vmatpush2.msra.mxu0 0.0
          %772 = vmatprep.subr.mxu0 0.0
          %773 = vmatpush2.msra.mxu0 0.0
          %774 = vmatprep.subr.mxu0 0.0
          %775 = vmatpush2.msra.mxu0 0.0
          %776 = vmatprep.subr.mxu0 0.0
          %777 = vmatpush2.msra.mxu0 0.0
          %778 = vmatprep.subr.mxu0 0.0
          %779 = vmatpush2.msra.mxu0 0.0
          %780 = vmatprep.mubr.f32.mxu0 0.0
          %781 = vmatmul.mubr.f32.gmra.mxu0 %v698
          %v782 = vpop.f32.mrf.mxu0
          %v783 = vadd.f32 %v715, %v782
          %v784 = vpop.f32.mrf.mxu0
          %785 = vdwg.mxu0
          %786 = vst [vmem:[%s239] sm:$0x1] %v783
        $region48: #{model_wrapper_forward.1} parent=39 // pred_fallthru
          _
        %s787 = sand.u32 %s151, 1
        %s788 = scalar_lea.sflag [#allocation4], %s787
        %s789 = sand.u32 %s151, 1
        %s790 = scalar_lea.vmem [#allocation3], %s789
        // Predicated region
        $region49: #{model_wrapper_forward.1} parent=39 // pred_check
          %p791 = pneg %p161
        $region50: #{model_wrapper_forward.1} parent=39 // pred_check_branch
          %793 = sbr.rel (%p791) target = $region52
        $region51: #{model_wrapper_forward.1} parent=39 // pred_region
          %s795 = ssub.s32 16, 16
          %796 = vsyncadd %s788, %s795
          %s797 = smul.addr %s23, 16
          %s798 = scalar_lea.hbm %s5, %s797
          %s800 = sshll.u32 %s790, 4
          %s801 = int_to_ptr.vmem [resolvable:$true] %s800
          %803 = dma.vmem_to_hbm [thread:$0]  %s801, 16, %s798, %s788
        $region52: #{model_wrapper_forward.1} parent=39 // pred_fallthru
          _
      $region40: #{model_wrapper_forward.1} parent=5 // pred_fallthru
        _
      %p804 = scmp.le.s32.totalorder 2, %s14
      // Predicated region
      $region53: #{model_wrapper_forward.1} parent=5 // pred_check
        %p805 = pneg %p804
      $region54: #{model_wrapper_forward.1} parent=5 // pred_check_branch
        %807 = sbr.rel (%p805) target = $region56
      $region55: #{model_wrapper_forward.1} parent=5 // pred_region
        %s808 = ssub.s32 %s14, 2
        // Predicated region
        $region57: #{model_wrapper_forward.1} parent=55 // pred_check
          %p809 = pneg %p167
        $region58: #{model_wrapper_forward.1} parent=55 // pred_check_branch
          %811 = sbr.rel (%p809) target = $region60
        $region59: #{model_wrapper_forward.1} parent=55 // pred_region
          %s812 = sand.u32 %s152, 1
          %s813 = scalar_lea.sflag [#allocation4], %s812
          %s814 = sand.u32 %s152, 1
          %s815 = scalar_lea.vmem [#allocation3], %s814
          %816 = dma.done %s813, 16
        $region60: #{model_wrapper_forward.1} parent=55 // pred_fallthru
          _
      $region56: #{model_wrapper_forward.1} parent=5 // pred_fallthru
        _
    $region6: #{model_wrapper_forward.1} parent=1 // loop_footer
      %s18 = sadd.s32 1, %s14
    $region7: #{model_wrapper_forward.1} parent=1 // loop_footer_branch
      %13 = sbr.rel target = $region3
    $region8: #{model_wrapper_forward.1} parent=1 // loop_exit
      _
    %817 = vsyncpa [#allocation4], 1
    %s818 = scalar_lea.sflag [#allocation4], 1
    %819 = vsyncpa %s818, 1

</llo_original>
